<compile_context>
chip_gen: v7x
topology: tpu7x:2x2x1
jax: 0.10.0
libtpu: 0.0.40
codegen_flags: <defaults>
</compile_context>

<pallas_src>
import functools

import jax
import jax.numpy as jnp
import numpy as np
from jax.experimental import pallas as pl
from jax.experimental.pallas import tpu as pltpu

BN_EPS = 1e-5

_VMEM = pl.BlockSpec(memory_space=pltpu.MemorySpace.VMEM)


# ------------------------------ fused kernel ----------------------------------
def _make_fused_kernel(kernel_sizes, match_channels, n, l, nlp):
    """Whole ResNetBlock; activations (C, NLp) f32, NLp = round_up(N*L, 128)."""
    nl = n * l
    needs_mask = nlp != nl

    def conv_same(x2d, w_ref, k, l_idx):
        """Conv1d, stride 1, replicate padding, as one im2col matmul.

        x2d   : (C_in, NLp) f32 value
        w_ref : (C_out, K*C_in) bf16 ref, flattened as index t*C_in + c
        """
        assert k % 2 == 1, "odd kernel sizes required for 'same' output length"
        pad = k // 2
        rolls = {0: x2d}

        def rolled(o):      # rolled(o)[c, j] == x2d[c, (j + o) mod NLp]
            if o not in rolls:
                rolls[o] = pltpu.roll(x2d, shift=(-o) % nlp, axis=1)
            return rolls[o]

        parts = []
        for t in range(k):
            d = t - pad
            cur = rolled(d)                      # interior taps: plain shift
            if d != 0:
                # Replicate padding: lanes whose clamped source offset differs
                # from d (per-sample boundaries + circular wrap between
                # samples / into the lane-pad region) pick a different roll.
                src = jnp.clip(l_idx + d, 0, l - 1) - l_idx      # (1, NLp) i32
                for o in range(0, d, 1 if d > 0 else -1):
                    cur = jnp.where(src == o, rolled(o), cur)
            parts.append(cur)
        slab = jnp.concatenate(parts, axis=0).astype(jnp.bfloat16)  # (K*C_in, NLp)
        return jnp.dot(w_ref[...], slab, preferred_element_type=jnp.float32)

    def bn(y, gamma_ref, beta_ref, valid, relu):
        """BatchNorm1d training-mode forward over the real (non-pad) columns."""
        inv_cnt = 1.0 / float(nl)
        ym = jnp.where(valid, y, 0.0) if needs_mask else y
        mean = jnp.sum(ym, axis=1, keepdims=True) * inv_cnt          # (C, 1)
        cen = y - mean
        if needs_mask:
            cen = jnp.where(valid, cen, 0.0)
        var = jnp.sum(cen * cen, axis=1, keepdims=True) * inv_cnt
        scale = gamma_ref[...] * jax.lax.rsqrt(var + BN_EPS)          # (C, 1)
        shift = beta_ref[...] - mean * scale
        out = y * scale + shift
        return jnp.maximum(out, 0.0) if relu else out

    def kernel(*refs):
        x_ref, o_ref = refs[0], refs[-1]

        # Hoisted iotas (JAX does not CSE broadcast_in_dim across uses).
        lane = jax.lax.broadcasted_iota(jnp.int32, (1, nlp), 1)
        l_idx = lane % l                      # intra-sample position
        valid = (lane < nl) if needs_mask else None

        x0 = x_ref[...]                       # (C_in, NLp) f32
        y = x0
        idx = 1
        for k in kernel_sizes:
            w_ref, g_ref, b_ref = refs[idx], refs[idx + 1], refs[idx + 2]
            idx += 3
            # Conv bias omitted on purpose: exactly cancelled by the
            # training-mode BN mean subtraction that follows.
            y = bn(conv_same(y, w_ref, k, l_idx), g_ref, b_ref, valid, relu=True)

        if match_channels:
            wr_ref, gr_ref, br_ref = refs[idx], refs[idx + 1], refs[idx + 2]
            r = jnp.dot(wr_ref[...], x0.astype(jnp.bfloat16),
                        preferred_element_type=jnp.float32)
            y = y + bn(r, gr_ref, br_ref, valid, relu=False)

        o_ref[...] = y.astype(o_ref.dtype)

    return kernel


# --------------------------------- wrapper -------------------------------------
def _round_up(x, m):
    return (x + m - 1) // m * m


@functools.partial(jax.jit, static_argnames=("match_channels",))
def resnet_block_forward(x, params, match_channels=True):
    n, c_in, l = x.shape
    blocks = params["blocks"]
    c_out = blocks[-1]["w"].shape[0]
    nl = n * l
    nlp = _round_up(nl, 128)                      # lane-dense fused pixel axis

    # Layout plumbing only (wrapper-side): (N, C_in, L) -> (C_in, N*L), pad the
    # fused lane axis to a multiple of 128 so kernel stores are unmasked.
    x2d = jnp.transpose(x, (1, 0, 2)).reshape(c_in, nl)
    if nlp != nl:
        x2d = jnp.pad(x2d, ((0, 0), (0, nlp - nl)))

    args = [x2d]
    ksizes = []
    for p in blocks:
        co, ci, k = p["w"].shape
        ksizes.append(k)
        # Pre-flatten to (C_out, K*C_in) (row index t*C_in + c) and cast to
        # bf16: MXU inputs only; all elementwise work stays f32 in-kernel.
        w_flat = jnp.transpose(p["w"], (0, 2, 1)).reshape(co, k * ci)
        args += [w_flat.astype(jnp.bfloat16),
                 p["gamma"].reshape(co, 1), p["beta"].reshape(co, 1)]
    if match_channels:
        r = params["residual"]
        args += [r["w"].reshape(c_out, c_in).astype(jnp.bfloat16),
                 r["gamma"].reshape(c_out, 1), r["beta"].reshape(c_out, 1)]

    # Explicit VMEM budget: I/O (double-buffered) plus headroom for the im2col
    # slabs, rolled copies and f32 accumulators.  Clamped below the v7x 64 MiB
    # physical ceiling; at the tested shapes this is tiny.
    io_bytes = sum(int(np.prod(a.shape)) * a.dtype.itemsize for a in args)
    io_bytes += c_out * nlp * x.dtype.itemsize
    vmem_limit = int(min(max(32 * io_bytes, 8 << 20), 48 << 20))

    out2d = pl.pallas_call(
        _make_fused_kernel(tuple(ksizes), match_channels, n, l, nlp),
        out_shape=jax.ShapeDtypeStruct((c_out, nlp), x.dtype),
        in_specs=[_VMEM] * len(args),
        out_specs=_VMEM,
        compiler_params=pltpu.CompilerParams(vmem_limit_bytes=vmem_limit),
    )(*args)

    out = out2d[:, :nl].reshape(c_out, n, l)
    return jnp.transpose(out, (1, 0, 2))          # (N, C_out, L)


# ---------------------------- pure-JAX reference -------------------------------
def _conv1d_ref(x, w, mxu_bf16):
    k = w.shape[2]
    pad = k // 2
    xp = jnp.pad(x, ((0, 0), (0, 0), (pad, pad)), mode="edge") if pad else x
    if mxu_bf16:
        xp, w = xp.astype(jnp.bfloat16), w.astype(jnp.bfloat16)
    return jax.lax.conv_general_dilated(
        xp, w, window_strides=(1,), padding="VALID",
        dimension_numbers=("NCH", "OIH", "NCH"),
        preferred_element_type=jnp.float32)


def _bn_ref(y, gamma, beta):
    mean = jnp.mean(y, axis=(0, 2), keepdims=True)
    var = jnp.mean((y - mean) ** 2, axis=(0, 2), keepdims=True)
    return (y - mean) / jnp.sqrt(var + BN_EPS) * gamma[None, :, None] \
        + beta[None, :, None]


def resnet_block_ref(x, params, match_channels=True, mxu_bf16=False):
    y = x
    for p in params["blocks"]:
        c = _conv1d_ref(y, p["w"], mxu_bf16) + p["b"][None, :, None]
        y = jnp.maximum(_bn_ref(c, p["gamma"], p["beta"]), 0.0)
    if match_channels:
        r = params["residual"]
        res = _conv1d_ref(x, r["w"], mxu_bf16) + r["b"][None, :, None]
        y = y + _bn_ref(res, r["gamma"], r["beta"])
    return y


# --------------------------------- main ----------------------------------------
def _init_params(key, in_channels, out_channels, kernel_sizes):
    channels = [in_channels, out_channels, out_channels, out_channels]
    blocks = []
    for i, k in enumerate(kernel_sizes):
        key, kw, kb, kg, kbt = jax.random.split(key, 5)
        blocks.append(dict(
            w=0.1 * jax.random.normal(kw, (channels[i + 1], channels[i], k), jnp.float32),
            b=0.1 * jax.random.normal(kb, (channels[i + 1],), jnp.float32),
            gamma=1.0 + 0.1 * jax.random.normal(kg, (channels[i + 1],), jnp.float32),
            beta=0.1 * jax.random.normal(kbt, (channels[i + 1],), jnp.float32),
        ))
    key, kw, kb, kg, kbt = jax.random.split(key, 5)
    residual = dict(
        w=0.1 * jax.random.normal(kw, (out_channels, in_channels, 1), jnp.float32),
        b=0.1 * jax.random.normal(kb, (out_channels,), jnp.float32),
        gamma=1.0 + 0.1 * jax.random.normal(kg, (out_channels,), jnp.float32),
        beta=0.1 * jax.random.normal(kbt, (out_channels,), jnp.float32),
    )
    return dict(blocks=blocks, residual=residual)


if __name__ == "__main__":
    key = jax.random.PRNGKey(0)
    N, C_in, C_out, L = 2, 4, 8, 16
    kernel_sizes = (7, 5, 3)          # odd kernels -> same output length (as in the module)

    key, kp, kx = jax.random.split(key, 3)
    params = _init_params(kp, C_in, C_out, kernel_sizes)
    x = jax.random.normal(kx, (N, C_in, L), jnp.float32)

    y = resnet_block_forward(x, params, match_channels=(C_in != C_out))
    jax.block_until_ready(y)
    assert y.shape == (N, C_out, L)

    # Tight check vs. a reference that rounds matmul inputs to bf16 the same way
    # the kernel does (isolates layout / padding / BN correctness).
    y_bf16ref = resnet_block_ref(x, params, match_channels=(C_in != C_out), mxu_bf16=True)
    np.testing.assert_allclose(np.asarray(y), np.asarray(y_bf16ref), rtol=2e-3, atol=2e-3)

    # Loose check vs. the full-f32 reference (bounds the bf16-MXU-input error).
    y_f32ref = resnet_block_ref(x, params, match_channels=(C_in != C_out), mxu_bf16=False)
    np.testing.assert_allclose(np.asarray(y), np.asarray(y_f32ref), rtol=5e-2, atol=5e-2)

    print("KERNEL_OK")
</pallas_src>

<mosaic_0001>
module attributes {stable_mosaic.version = 11 : i64} {
  func.func @kernel(%arg0: memref<4x128xf32, #tpu.memory_space<vmem>>, %arg1: memref<8x28xbf16, #tpu.memory_space<vmem>>, %arg2: memref<8x1xf32, #tpu.memory_space<vmem>>, %arg3: memref<8x1xf32, #tpu.memory_space<vmem>>, %arg4: memref<8x40xbf16, #tpu.memory_space<vmem>>, %arg5: memref<8x1xf32, #tpu.memory_space<vmem>>, %arg6: memref<8x1xf32, #tpu.memory_space<vmem>>, %arg7: memref<8x24xbf16, #tpu.memory_space<vmem>>, %arg8: memref<8x1xf32, #tpu.memory_space<vmem>>, %arg9: memref<8x1xf32, #tpu.memory_space<vmem>>, %arg10: memref<8x4xbf16, #tpu.memory_space<vmem>>, %arg11: memref<8x1xf32, #tpu.memory_space<vmem>>, %arg12: memref<8x1xf32, #tpu.memory_space<vmem>>, %arg13: memref<8x128xf32, #tpu.memory_space<vmem>>) attributes {dimension_semantics = [], scalar_prefetch = 0 : i64, scratch_operands = 0 : i64, tpu.core_type = #tpu.core_type<tc>} {
    %0 = tpu.iota {dimensions = array<i32: 1>} : vector<1x128xi32>
    %c16_i32 = arith.constant 16 : i32
    %c0_i32 = arith.constant 0 : i32
    %1 = arith.cmpi eq, %c16_i32, %c0_i32 : i32
    %c1_i32 = arith.constant 1 : i32
    %2 = arith.select %1, %c1_i32, %c16_i32 : i32
    %3 = vector.broadcast %2 : i32 to vector<1x128xi32>
    %4 = arith.remsi %0, %3 : vector<1x128xi32>
    %c0_i32_0 = arith.constant 0 : i32
    %5 = vector.broadcast %c0_i32_0 : i32 to vector<1x128xi32>
    %6 = arith.cmpi ne, %4, %5 : vector<1x128xi32>
    %c0_i32_1 = arith.constant 0 : i32
    %7 = vector.broadcast %c0_i32_1 : i32 to vector<1x128xi32>
    %8 = arith.cmpi slt, %4, %7 : vector<1x128xi32>
    %c0_i32_2 = arith.constant 0 : i32
    %9 = arith.cmpi slt, %2, %c0_i32_2 : i32
    %10 = vector.broadcast %9 : i1 to vector<1x128xi1>
    %11 = vector.broadcast %10 : vector<1x128xi1> to vector<1x128xi1>
    %12 = arith.xori %8, %11 : vector<1x128xi1>
    %13 = arith.andi %12, %6 : vector<1x128xi1>
    %14 = vector.broadcast %2 : i32 to vector<1x128xi32>
    %15 = arith.addi %4, %14 : vector<1x128xi32>
    %16 = arith.select %13, %15, %4 : vector<1x128xi1>, vector<1x128xi32>
    %c32_i32 = arith.constant 32 : i32
    %17 = vector.broadcast %c32_i32 : i32 to vector<1x128xi32>
    %18 = arith.cmpi slt, %0, %17 : vector<1x128xi32>
    %c0 = arith.constant 0 : index
    %c0_3 = arith.constant 0 : index
    %19 = vector.load %arg0[%c0, %c0_3] : memref<4x128xf32, #tpu.memory_space<vmem>>, vector<4x128xf32>
    %c3_i32 = arith.constant 3 : i32
    %20 = tpu.dynamic_rotate %19 by %c3_i32 dim 1 : vector<4x128xf32>, i32 -> vector<4x128xf32>
    %c-3_i32 = arith.constant -3 : i32
    %21 = vector.broadcast %c-3_i32 : i32 to vector<1x128xi32>
    %22 = arith.addi %16, %21 : vector<1x128xi32>
    %c0_i32_4 = arith.constant 0 : i32
    %c15_i32 = arith.constant 15 : i32
    %23 = vector.broadcast %c0_i32_4 : i32 to vector<1x128xi32>
    %24 = arith.maxsi %23, %22 : vector<1x128xi32>
    %25 = vector.broadcast %c15_i32 : i32 to vector<1x128xi32>
    %26 = arith.minsi %25, %24 : vector<1x128xi32>
    %27 = arith.subi %26, %16 : vector<1x128xi32>
    %c0_i32_5 = arith.constant 0 : i32
    %28 = vector.broadcast %c0_i32_5 : i32 to vector<1x128xi32>
    %29 = arith.cmpi eq, %27, %28 : vector<1x128xi32>
    %30 = vector.shape_cast %29 : vector<1x128xi1> to vector<1x128xi1>
    %31 = vector.broadcast %30 : vector<1x128xi1> to vector<4x128xi1>
    %32 = arith.select %31, %19, %20 : vector<4x128xi1>, vector<4x128xf32>
    %c-1_i32 = arith.constant -1 : i32
    %33 = vector.broadcast %c-1_i32 : i32 to vector<1x128xi32>
    %34 = arith.cmpi eq, %27, %33 : vector<1x128xi32>
    %c1_i32_6 = arith.constant 1 : i32
    %35 = tpu.dynamic_rotate %19 by %c1_i32_6 dim 1 : vector<4x128xf32>, i32 -> vector<4x128xf32>
    %36 = vector.shape_cast %34 : vector<1x128xi1> to vector<1x128xi1>
    %37 = vector.broadcast %36 : vector<1x128xi1> to vector<4x128xi1>
    %38 = arith.select %37, %35, %32 : vector<4x128xi1>, vector<4x128xf32>
    %c-2_i32 = arith.constant -2 : i32
    %39 = vector.broadcast %c-2_i32 : i32 to vector<1x128xi32>
    %40 = arith.cmpi eq, %27, %39 : vector<1x128xi32>
    %c2_i32 = arith.constant 2 : i32
    %41 = tpu.dynamic_rotate %19 by %c2_i32 dim 1 : vector<4x128xf32>, i32 -> vector<4x128xf32>
    %42 = vector.shape_cast %40 : vector<1x128xi1> to vector<1x128xi1>
    %43 = vector.broadcast %42 : vector<1x128xi1> to vector<4x128xi1>
    %44 = arith.select %43, %41, %38 : vector<4x128xi1>, vector<4x128xf32>
    %c-2_i32_7 = arith.constant -2 : i32
    %45 = vector.broadcast %c-2_i32_7 : i32 to vector<1x128xi32>
    %46 = arith.addi %16, %45 : vector<1x128xi32>
    %c0_i32_8 = arith.constant 0 : i32
    %c15_i32_9 = arith.constant 15 : i32
    %47 = vector.broadcast %c0_i32_8 : i32 to vector<1x128xi32>
    %48 = arith.maxsi %47, %46 : vector<1x128xi32>
    %49 = vector.broadcast %c15_i32_9 : i32 to vector<1x128xi32>
    %50 = arith.minsi %49, %48 : vector<1x128xi32>
    %51 = arith.subi %50, %16 : vector<1x128xi32>
    %c0_i32_10 = arith.constant 0 : i32
    %52 = vector.broadcast %c0_i32_10 : i32 to vector<1x128xi32>
    %53 = arith.cmpi eq, %51, %52 : vector<1x128xi32>
    %54 = vector.shape_cast %53 : vector<1x128xi1> to vector<1x128xi1>
    %55 = vector.broadcast %54 : vector<1x128xi1> to vector<4x128xi1>
    %56 = arith.select %55, %19, %41 : vector<4x128xi1>, vector<4x128xf32>
    %c-1_i32_11 = arith.constant -1 : i32
    %57 = vector.broadcast %c-1_i32_11 : i32 to vector<1x128xi32>
    %58 = arith.cmpi eq, %51, %57 : vector<1x128xi32>
    %59 = vector.shape_cast %58 : vector<1x128xi1> to vector<1x128xi1>
    %60 = vector.broadcast %59 : vector<1x128xi1> to vector<4x128xi1>
    %61 = arith.select %60, %35, %56 : vector<4x128xi1>, vector<4x128xf32>
    %c-1_i32_12 = arith.constant -1 : i32
    %62 = vector.broadcast %c-1_i32_12 : i32 to vector<1x128xi32>
    %63 = arith.addi %16, %62 : vector<1x128xi32>
    %c0_i32_13 = arith.constant 0 : i32
    %c15_i32_14 = arith.constant 15 : i32
    %64 = vector.broadcast %c0_i32_13 : i32 to vector<1x128xi32>
    %65 = arith.maxsi %64, %63 : vector<1x128xi32>
    %66 = vector.broadcast %c15_i32_14 : i32 to vector<1x128xi32>
    %67 = arith.minsi %66, %65 : vector<1x128xi32>
    %68 = arith.subi %67, %16 : vector<1x128xi32>
    %c0_i32_15 = arith.constant 0 : i32
    %69 = vector.broadcast %c0_i32_15 : i32 to vector<1x128xi32>
    %70 = arith.cmpi eq, %68, %69 : vector<1x128xi32>
    %71 = vector.shape_cast %70 : vector<1x128xi1> to vector<1x128xi1>
    %72 = vector.broadcast %71 : vector<1x128xi1> to vector<4x128xi1>
    %73 = arith.select %72, %19, %35 : vector<4x128xi1>, vector<4x128xf32>
    %c127_i32 = arith.constant 127 : i32
    %74 = tpu.dynamic_rotate %19 by %c127_i32 dim 1 : vector<4x128xf32>, i32 -> vector<4x128xf32>
    %c1_i32_16 = arith.constant 1 : i32
    %75 = vector.broadcast %c1_i32_16 : i32 to vector<1x128xi32>
    %76 = arith.addi %16, %75 : vector<1x128xi32>
    %c0_i32_17 = arith.constant 0 : i32
    %c15_i32_18 = arith.constant 15 : i32
    %77 = vector.broadcast %c0_i32_17 : i32 to vector<1x128xi32>
    %78 = arith.maxsi %77, %76 : vector<1x128xi32>
    %79 = vector.broadcast %c15_i32_18 : i32 to vector<1x128xi32>
    %80 = arith.minsi %79, %78 : vector<1x128xi32>
    %81 = arith.subi %80, %16 : vector<1x128xi32>
    %c0_i32_19 = arith.constant 0 : i32
    %82 = vector.broadcast %c0_i32_19 : i32 to vector<1x128xi32>
    %83 = arith.cmpi eq, %81, %82 : vector<1x128xi32>
    %84 = vector.shape_cast %83 : vector<1x128xi1> to vector<1x128xi1>
    %85 = vector.broadcast %84 : vector<1x128xi1> to vector<4x128xi1>
    %86 = arith.select %85, %19, %74 : vector<4x128xi1>, vector<4x128xf32>
    %c126_i32 = arith.constant 126 : i32
    %87 = tpu.dynamic_rotate %19 by %c126_i32 dim 1 : vector<4x128xf32>, i32 -> vector<4x128xf32>
    %c2_i32_20 = arith.constant 2 : i32
    %88 = vector.broadcast %c2_i32_20 : i32 to vector<1x128xi32>
    %89 = arith.addi %16, %88 : vector<1x128xi32>
    %c0_i32_21 = arith.constant 0 : i32
    %c15_i32_22 = arith.constant 15 : i32
    %90 = vector.broadcast %c0_i32_21 : i32 to vector<1x128xi32>
    %91 = arith.maxsi %90, %89 : vector<1x128xi32>
    %92 = vector.broadcast %c15_i32_22 : i32 to vector<1x128xi32>
    %93 = arith.minsi %92, %91 : vector<1x128xi32>
    %94 = arith.subi %93, %16 : vector<1x128xi32>
    %c0_i32_23 = arith.constant 0 : i32
    %95 = vector.broadcast %c0_i32_23 : i32 to vector<1x128xi32>
    %96 = arith.cmpi eq, %94, %95 : vector<1x128xi32>
    %97 = vector.shape_cast %96 : vector<1x128xi1> to vector<1x128xi1>
    %98 = vector.broadcast %97 : vector<1x128xi1> to vector<4x128xi1>
    %99 = arith.select %98, %19, %87 : vector<4x128xi1>, vector<4x128xf32>
    %c1_i32_24 = arith.constant 1 : i32
    %100 = vector.broadcast %c1_i32_24 : i32 to vector<1x128xi32>
    %101 = arith.cmpi eq, %94, %100 : vector<1x128xi32>
    %102 = vector.shape_cast %101 : vector<1x128xi1> to vector<1x128xi1>
    %103 = vector.broadcast %102 : vector<1x128xi1> to vector<4x128xi1>
    %104 = arith.select %103, %74, %99 : vector<4x128xi1>, vector<4x128xf32>
    %c125_i32 = arith.constant 125 : i32
    %105 = tpu.dynamic_rotate %19 by %c125_i32 dim 1 : vector<4x128xf32>, i32 -> vector<4x128xf32>
    %c3_i32_25 = arith.constant 3 : i32
    %106 = vector.broadcast %c3_i32_25 : i32 to vector<1x128xi32>
    %107 = arith.addi %16, %106 : vector<1x128xi32>
    %c0_i32_26 = arith.constant 0 : i32
    %c15_i32_27 = arith.constant 15 : i32
    %108 = vector.broadcast %c0_i32_26 : i32 to vector<1x128xi32>
    %109 = arith.maxsi %108, %107 : vector<1x128xi32>
    %110 = vector.broadcast %c15_i32_27 : i32 to vector<1x128xi32>
    %111 = arith.minsi %110, %109 : vector<1x128xi32>
    %112 = arith.subi %111, %16 : vector<1x128xi32>
    %c0_i32_28 = arith.constant 0 : i32
    %113 = vector.broadcast %c0_i32_28 : i32 to vector<1x128xi32>
    %114 = arith.cmpi eq, %112, %113 : vector<1x128xi32>
    %115 = vector.shape_cast %114 : vector<1x128xi1> to vector<1x128xi1>
    %116 = vector.broadcast %115 : vector<1x128xi1> to vector<4x128xi1>
    %117 = arith.select %116, %19, %105 : vector<4x128xi1>, vector<4x128xf32>
    %c1_i32_29 = arith.constant 1 : i32
    %118 = vector.broadcast %c1_i32_29 : i32 to vector<1x128xi32>
    %119 = arith.cmpi eq, %112, %118 : vector<1x128xi32>
    %120 = vector.shape_cast %119 : vector<1x128xi1> to vector<1x128xi1>
    %121 = vector.broadcast %120 : vector<1x128xi1> to vector<4x128xi1>
    %122 = arith.select %121, %74, %117 : vector<4x128xi1>, vector<4x128xf32>
    %c2_i32_30 = arith.constant 2 : i32
    %123 = vector.broadcast %c2_i32_30 : i32 to vector<1x128xi32>
    %124 = arith.cmpi eq, %112, %123 : vector<1x128xi32>
    %125 = vector.shape_cast %124 : vector<1x128xi1> to vector<1x128xi1>
    %126 = vector.broadcast %125 : vector<1x128xi1> to vector<4x128xi1>
    %127 = arith.select %126, %87, %122 : vector<4x128xi1>, vector<4x128xf32>
    %128 = tpu.concatenate %44, %61, %73, %19, %86, %104, %127 in 0 : vector<4x128xf32>, vector<4x128xf32>, vector<4x128xf32>, vector<4x128xf32>, vector<4x128xf32>, vector<4x128xf32>, vector<4x128xf32> -> vector<28x128xf32>
    %129 = arith.truncf %128 : vector<28x128xf32> to vector<28x128xbf16>
    %c0_31 = arith.constant 0 : index
    %c0_32 = arith.constant 0 : index
    %130 = vector.load %arg1[%c0_31, %c0_32] : memref<8x28xbf16, #tpu.memory_space<vmem>>, vector<8x28xbf16>
    %cst = arith.constant dense<0.000000e+00> : vector<8x128xf32>
    %131 = tpu.matmul %130, %129, %cst {dimension_numbers = #tpu.dot_dimension_numbers<[1], [0], [0], [1], [0, 0, 1, 1], [], []>} : vector<8x28xbf16>, vector<28x128xbf16>, vector<8x128xf32> -> vector<8x128xf32>
    %cst_33 = arith.constant 0.000000e+00 : f32
    %132 = vector.shape_cast %18 : vector<1x128xi1> to vector<1x128xi1>
    %133 = vector.broadcast %132 : vector<1x128xi1> to vector<8x128xi1>
    %134 = vector.broadcast %cst_33 : f32 to vector<8x128xf32>
    %135 = arith.select %133, %131, %134 : vector<8x128xi1>, vector<8x128xf32>
    %cst_34 = arith.constant dense<0.000000e+00> : vector<8xf32>
    %136 = vector.multi_reduction <add>, %135, %cst_34 [1] : vector<8x128xf32> to vector<8xf32>
    %137 = vector.shape_cast %136 : vector<8xf32> to vector<8x1xf32>
    %cst_35 = arith.constant 3.125000e-02 : f32
    %138 = vector.broadcast %cst_35 : f32 to vector<8x1xf32>
    %139 = arith.mulf %137, %138 : vector<8x1xf32>
    %140 = vector.broadcast %139 : vector<8x1xf32> to vector<8x128xf32>
    %141 = arith.subf %131, %140 : vector<8x128xf32>
    %cst_36 = arith.constant 0.000000e+00 : f32
    %142 = vector.shape_cast %18 : vector<1x128xi1> to vector<1x128xi1>
    %143 = vector.broadcast %142 : vector<1x128xi1> to vector<8x128xi1>
    %144 = vector.broadcast %cst_36 : f32 to vector<8x128xf32>
    %145 = arith.select %143, %141, %144 : vector<8x128xi1>, vector<8x128xf32>
    %146 = arith.mulf %145, %145 : vector<8x128xf32>
    %cst_37 = arith.constant dense<0.000000e+00> : vector<8xf32>
    %147 = vector.multi_reduction <add>, %146, %cst_37 [1] : vector<8x128xf32> to vector<8xf32>
    %148 = vector.shape_cast %147 : vector<8xf32> to vector<8x1xf32>
    %cst_38 = arith.constant 3.125000e-02 : f32
    %149 = vector.broadcast %cst_38 : f32 to vector<8x1xf32>
    %150 = arith.mulf %148, %149 : vector<8x1xf32>
    %c0_39 = arith.constant 0 : index
    %c0_40 = arith.constant 0 : index
    %151 = vector.load %arg2[%c0_39, %c0_40] : memref<8x1xf32, #tpu.memory_space<vmem>>, vector<8x1xf32>
    %cst_41 = arith.constant 9.99999974E-6 : f32
    %152 = vector.broadcast %cst_41 : f32 to vector<8x1xf32>
    %153 = arith.addf %150, %152 : vector<8x1xf32>
    %154 = math.rsqrt %153 : vector<8x1xf32>
    %155 = arith.mulf %151, %154 : vector<8x1xf32>
    %c0_42 = arith.constant 0 : index
    %c0_43 = arith.constant 0 : index
    %156 = vector.load %arg3[%c0_42, %c0_43] : memref<8x1xf32, #tpu.memory_space<vmem>>, vector<8x1xf32>
    %157 = arith.mulf %139, %155 : vector<8x1xf32>
    %158 = arith.subf %156, %157 : vector<8x1xf32>
    %159 = vector.broadcast %155 : vector<8x1xf32> to vector<8x128xf32>
    %160 = arith.mulf %131, %159 : vector<8x128xf32>
    %161 = vector.broadcast %158 : vector<8x1xf32> to vector<8x128xf32>
    %162 = arith.addf %160, %161 : vector<8x128xf32>
    %cst_44 = arith.constant 0.000000e+00 : f32
    %163 = vector.broadcast %cst_44 : f32 to vector<8x128xf32>
    %164 = arith.maximumf %162, %163 : vector<8x128xf32>
    %c2_i32_45 = arith.constant 2 : i32
    %165 = tpu.dynamic_rotate %164 by %c2_i32_45 dim 1 : vector<8x128xf32>, i32 -> vector<8x128xf32>
    %c-2_i32_46 = arith.constant -2 : i32
    %166 = vector.broadcast %c-2_i32_46 : i32 to vector<1x128xi32>
    %167 = arith.addi %16, %166 : vector<1x128xi32>
    %c0_i32_47 = arith.constant 0 : i32
    %c15_i32_48 = arith.constant 15 : i32
    %168 = vector.broadcast %c0_i32_47 : i32 to vector<1x128xi32>
    %169 = arith.maxsi %168, %167 : vector<1x128xi32>
    %170 = vector.broadcast %c15_i32_48 : i32 to vector<1x128xi32>
    %171 = arith.minsi %170, %169 : vector<1x128xi32>
    %172 = arith.subi %171, %16 : vector<1x128xi32>
    %c0_i32_49 = arith.constant 0 : i32
    %173 = vector.broadcast %c0_i32_49 : i32 to vector<1x128xi32>
    %174 = arith.cmpi eq, %172, %173 : vector<1x128xi32>
    %175 = vector.shape_cast %174 : vector<1x128xi1> to vector<1x128xi1>
    %176 = vector.broadcast %175 : vector<1x128xi1> to vector<8x128xi1>
    %177 = arith.select %176, %164, %165 : vector<8x128xi1>, vector<8x128xf32>
    %c-1_i32_50 = arith.constant -1 : i32
    %178 = vector.broadcast %c-1_i32_50 : i32 to vector<1x128xi32>
    %179 = arith.cmpi eq, %172, %178 : vector<1x128xi32>
    %c1_i32_51 = arith.constant 1 : i32
    %180 = tpu.dynamic_rotate %164 by %c1_i32_51 dim 1 : vector<8x128xf32>, i32 -> vector<8x128xf32>
    %181 = vector.shape_cast %179 : vector<1x128xi1> to vector<1x128xi1>
    %182 = vector.broadcast %181 : vector<1x128xi1> to vector<8x128xi1>
    %183 = arith.select %182, %180, %177 : vector<8x128xi1>, vector<8x128xf32>
    %c-1_i32_52 = arith.constant -1 : i32
    %184 = vector.broadcast %c-1_i32_52 : i32 to vector<1x128xi32>
    %185 = arith.addi %16, %184 : vector<1x128xi32>
    %c0_i32_53 = arith.constant 0 : i32
    %c15_i32_54 = arith.constant 15 : i32
    %186 = vector.broadcast %c0_i32_53 : i32 to vector<1x128xi32>
    %187 = arith.maxsi %186, %185 : vector<1x128xi32>
    %188 = vector.broadcast %c15_i32_54 : i32 to vector<1x128xi32>
    %189 = arith.minsi %188, %187 : vector<1x128xi32>
    %190 = arith.subi %189, %16 : vector<1x128xi32>
    %c0_i32_55 = arith.constant 0 : i32
    %191 = vector.broadcast %c0_i32_55 : i32 to vector<1x128xi32>
    %192 = arith.cmpi eq, %190, %191 : vector<1x128xi32>
    %193 = vector.shape_cast %192 : vector<1x128xi1> to vector<1x128xi1>
    %194 = vector.broadcast %193 : vector<1x128xi1> to vector<8x128xi1>
    %195 = arith.select %194, %164, %180 : vector<8x128xi1>, vector<8x128xf32>
    %c127_i32_56 = arith.constant 127 : i32
    %196 = tpu.dynamic_rotate %164 by %c127_i32_56 dim 1 : vector<8x128xf32>, i32 -> vector<8x128xf32>
    %c1_i32_57 = arith.constant 1 : i32
    %197 = vector.broadcast %c1_i32_57 : i32 to vector<1x128xi32>
    %198 = arith.addi %16, %197 : vector<1x128xi32>
    %c0_i32_58 = arith.constant 0 : i32
    %c15_i32_59 = arith.constant 15 : i32
    %199 = vector.broadcast %c0_i32_58 : i32 to vector<1x128xi32>
    %200 = arith.maxsi %199, %198 : vector<1x128xi32>
    %201 = vector.broadcast %c15_i32_59 : i32 to vector<1x128xi32>
    %202 = arith.minsi %201, %200 : vector<1x128xi32>
    %203 = arith.subi %202, %16 : vector<1x128xi32>
    %c0_i32_60 = arith.constant 0 : i32
    %204 = vector.broadcast %c0_i32_60 : i32 to vector<1x128xi32>
    %205 = arith.cmpi eq, %203, %204 : vector<1x128xi32>
    %206 = vector.shape_cast %205 : vector<1x128xi1> to vector<1x128xi1>
    %207 = vector.broadcast %206 : vector<1x128xi1> to vector<8x128xi1>
    %208 = arith.select %207, %164, %196 : vector<8x128xi1>, vector<8x128xf32>
    %c126_i32_61 = arith.constant 126 : i32
    %209 = tpu.dynamic_rotate %164 by %c126_i32_61 dim 1 : vector<8x128xf32>, i32 -> vector<8x128xf32>
    %c2_i32_62 = arith.constant 2 : i32
    %210 = vector.broadcast %c2_i32_62 : i32 to vector<1x128xi32>
    %211 = arith.addi %16, %210 : vector<1x128xi32>
    %c0_i32_63 = arith.constant 0 : i32
    %c15_i32_64 = arith.constant 15 : i32
    %212 = vector.broadcast %c0_i32_63 : i32 to vector<1x128xi32>
    %213 = arith.maxsi %212, %211 : vector<1x128xi32>
    %214 = vector.broadcast %c15_i32_64 : i32 to vector<1x128xi32>
    %215 = arith.minsi %214, %213 : vector<1x128xi32>
    %216 = arith.subi %215, %16 : vector<1x128xi32>
    %c0_i32_65 = arith.constant 0 : i32
    %217 = vector.broadcast %c0_i32_65 : i32 to vector<1x128xi32>
    %218 = arith.cmpi eq, %216, %217 : vector<1x128xi32>
    %219 = vector.shape_cast %218 : vector<1x128xi1> to vector<1x128xi1>
    %220 = vector.broadcast %219 : vector<1x128xi1> to vector<8x128xi1>
    %221 = arith.select %220, %164, %209 : vector<8x128xi1>, vector<8x128xf32>
    %c1_i32_66 = arith.constant 1 : i32
    %222 = vector.broadcast %c1_i32_66 : i32 to vector<1x128xi32>
    %223 = arith.cmpi eq, %216, %222 : vector<1x128xi32>
    %224 = vector.shape_cast %223 : vector<1x128xi1> to vector<1x128xi1>
    %225 = vector.broadcast %224 : vector<1x128xi1> to vector<8x128xi1>
    %226 = arith.select %225, %196, %221 : vector<8x128xi1>, vector<8x128xf32>
    %227 = tpu.concatenate %183, %195, %164, %208, %226 in 0 : vector<8x128xf32>, vector<8x128xf32>, vector<8x128xf32>, vector<8x128xf32>, vector<8x128xf32> -> vector<40x128xf32>
    %228 = arith.truncf %227 : vector<40x128xf32> to vector<40x128xbf16>
    %c0_67 = arith.constant 0 : index
    %c0_68 = arith.constant 0 : index
    %229 = vector.load %arg4[%c0_67, %c0_68] : memref<8x40xbf16, #tpu.memory_space<vmem>>, vector<8x40xbf16>
    %cst_69 = arith.constant dense<0.000000e+00> : vector<8x128xf32>
    %230 = tpu.matmul %229, %228, %cst_69 {dimension_numbers = #tpu.dot_dimension_numbers<[1], [0], [0], [1], [0, 0, 1, 1], [], []>} : vector<8x40xbf16>, vector<40x128xbf16>, vector<8x128xf32> -> vector<8x128xf32>
    %cst_70 = arith.constant 0.000000e+00 : f32
    %231 = vector.shape_cast %18 : vector<1x128xi1> to vector<1x128xi1>
    %232 = vector.broadcast %231 : vector<1x128xi1> to vector<8x128xi1>
    %233 = vector.broadcast %cst_70 : f32 to vector<8x128xf32>
    %234 = arith.select %232, %230, %233 : vector<8x128xi1>, vector<8x128xf32>
    %cst_71 = arith.constant dense<0.000000e+00> : vector<8xf32>
    %235 = vector.multi_reduction <add>, %234, %cst_71 [1] : vector<8x128xf32> to vector<8xf32>
    %236 = vector.shape_cast %235 : vector<8xf32> to vector<8x1xf32>
    %cst_72 = arith.constant 3.125000e-02 : f32
    %237 = vector.broadcast %cst_72 : f32 to vector<8x1xf32>
    %238 = arith.mulf %236, %237 : vector<8x1xf32>
    %239 = vector.broadcast %238 : vector<8x1xf32> to vector<8x128xf32>
    %240 = arith.subf %230, %239 : vector<8x128xf32>
    %cst_73 = arith.constant 0.000000e+00 : f32
    %241 = vector.shape_cast %18 : vector<1x128xi1> to vector<1x128xi1>
    %242 = vector.broadcast %241 : vector<1x128xi1> to vector<8x128xi1>
    %243 = vector.broadcast %cst_73 : f32 to vector<8x128xf32>
    %244 = arith.select %242, %240, %243 : vector<8x128xi1>, vector<8x128xf32>
    %245 = arith.mulf %244, %244 : vector<8x128xf32>
    %cst_74 = arith.constant dense<0.000000e+00> : vector<8xf32>
    %246 = vector.multi_reduction <add>, %245, %cst_74 [1] : vector<8x128xf32> to vector<8xf32>
    %247 = vector.shape_cast %246 : vector<8xf32> to vector<8x1xf32>
    %cst_75 = arith.constant 3.125000e-02 : f32
    %248 = vector.broadcast %cst_75 : f32 to vector<8x1xf32>
    %249 = arith.mulf %247, %248 : vector<8x1xf32>
    %c0_76 = arith.constant 0 : index
    %c0_77 = arith.constant 0 : index
    %250 = vector.load %arg5[%c0_76, %c0_77] : memref<8x1xf32, #tpu.memory_space<vmem>>, vector<8x1xf32>
    %cst_78 = arith.constant 9.99999974E-6 : f32
    %251 = vector.broadcast %cst_78 : f32 to vector<8x1xf32>
    %252 = arith.addf %249, %251 : vector<8x1xf32>
    %253 = math.rsqrt %252 : vector<8x1xf32>
    %254 = arith.mulf %250, %253 : vector<8x1xf32>
    %c0_79 = arith.constant 0 : index
    %c0_80 = arith.constant 0 : index
    %255 = vector.load %arg6[%c0_79, %c0_80] : memref<8x1xf32, #tpu.memory_space<vmem>>, vector<8x1xf32>
    %256 = arith.mulf %238, %254 : vector<8x1xf32>
    %257 = arith.subf %255, %256 : vector<8x1xf32>
    %258 = vector.broadcast %254 : vector<8x1xf32> to vector<8x128xf32>
    %259 = arith.mulf %230, %258 : vector<8x128xf32>
    %260 = vector.broadcast %257 : vector<8x1xf32> to vector<8x128xf32>
    %261 = arith.addf %259, %260 : vector<8x128xf32>
    %cst_81 = arith.constant 0.000000e+00 : f32
    %262 = vector.broadcast %cst_81 : f32 to vector<8x128xf32>
    %263 = arith.maximumf %261, %262 : vector<8x128xf32>
    %c1_i32_82 = arith.constant 1 : i32
    %264 = tpu.dynamic_rotate %263 by %c1_i32_82 dim 1 : vector<8x128xf32>, i32 -> vector<8x128xf32>
    %c-1_i32_83 = arith.constant -1 : i32
    %265 = vector.broadcast %c-1_i32_83 : i32 to vector<1x128xi32>
    %266 = arith.addi %16, %265 : vector<1x128xi32>
    %c0_i32_84 = arith.constant 0 : i32
    %c15_i32_85 = arith.constant 15 : i32
    %267 = vector.broadcast %c0_i32_84 : i32 to vector<1x128xi32>
    %268 = arith.maxsi %267, %266 : vector<1x128xi32>
    %269 = vector.broadcast %c15_i32_85 : i32 to vector<1x128xi32>
    %270 = arith.minsi %269, %268 : vector<1x128xi32>
    %271 = arith.subi %270, %16 : vector<1x128xi32>
    %c0_i32_86 = arith.constant 0 : i32
    %272 = vector.broadcast %c0_i32_86 : i32 to vector<1x128xi32>
    %273 = arith.cmpi eq, %271, %272 : vector<1x128xi32>
    %274 = vector.shape_cast %273 : vector<1x128xi1> to vector<1x128xi1>
    %275 = vector.broadcast %274 : vector<1x128xi1> to vector<8x128xi1>
    %276 = arith.select %275, %263, %264 : vector<8x128xi1>, vector<8x128xf32>
    %c127_i32_87 = arith.constant 127 : i32
    %277 = tpu.dynamic_rotate %263 by %c127_i32_87 dim 1 : vector<8x128xf32>, i32 -> vector<8x128xf32>
    %c1_i32_88 = arith.constant 1 : i32
    %278 = vector.broadcast %c1_i32_88 : i32 to vector<1x128xi32>
    %279 = arith.addi %16, %278 : vector<1x128xi32>
    %c0_i32_89 = arith.constant 0 : i32
    %c15_i32_90 = arith.constant 15 : i32
    %280 = vector.broadcast %c0_i32_89 : i32 to vector<1x128xi32>
    %281 = arith.maxsi %280, %279 : vector<1x128xi32>
    %282 = vector.broadcast %c15_i32_90 : i32 to vector<1x128xi32>
    %283 = arith.minsi %282, %281 : vector<1x128xi32>
    %284 = arith.subi %283, %16 : vector<1x128xi32>
    %c0_i32_91 = arith.constant 0 : i32
    %285 = vector.broadcast %c0_i32_91 : i32 to vector<1x128xi32>
    %286 = arith.cmpi eq, %284, %285 : vector<1x128xi32>
    %287 = vector.shape_cast %286 : vector<1x128xi1> to vector<1x128xi1>
    %288 = vector.broadcast %287 : vector<1x128xi1> to vector<8x128xi1>
    %289 = arith.select %288, %263, %277 : vector<8x128xi1>, vector<8x128xf32>
    %290 = tpu.concatenate %276, %263, %289 in 0 : vector<8x128xf32>, vector<8x128xf32>, vector<8x128xf32> -> vector<24x128xf32>
    %291 = arith.truncf %290 : vector<24x128xf32> to vector<24x128xbf16>
    %c0_92 = arith.constant 0 : index
    %c0_93 = arith.constant 0 : index
    %292 = vector.load %arg7[%c0_92, %c0_93] : memref<8x24xbf16, #tpu.memory_space<vmem>>, vector<8x24xbf16>
    %cst_94 = arith.constant dense<0.000000e+00> : vector<8x128xf32>
    %293 = tpu.matmul %292, %291, %cst_94 {dimension_numbers = #tpu.dot_dimension_numbers<[1], [0], [0], [1], [0, 0, 1, 1], [], []>} : vector<8x24xbf16>, vector<24x128xbf16>, vector<8x128xf32> -> vector<8x128xf32>
    %cst_95 = arith.constant 0.000000e+00 : f32
    %294 = vector.shape_cast %18 : vector<1x128xi1> to vector<1x128xi1>
    %295 = vector.broadcast %294 : vector<1x128xi1> to vector<8x128xi1>
    %296 = vector.broadcast %cst_95 : f32 to vector<8x128xf32>
    %297 = arith.select %295, %293, %296 : vector<8x128xi1>, vector<8x128xf32>
    %cst_96 = arith.constant dense<0.000000e+00> : vector<8xf32>
    %298 = vector.multi_reduction <add>, %297, %cst_96 [1] : vector<8x128xf32> to vector<8xf32>
    %299 = vector.shape_cast %298 : vector<8xf32> to vector<8x1xf32>
    %cst_97 = arith.constant 3.125000e-02 : f32
    %300 = vector.broadcast %cst_97 : f32 to vector<8x1xf32>
    %301 = arith.mulf %299, %300 : vector<8x1xf32>
    %302 = vector.broadcast %301 : vector<8x1xf32> to vector<8x128xf32>
    %303 = arith.subf %293, %302 : vector<8x128xf32>
    %cst_98 = arith.constant 0.000000e+00 : f32
    %304 = vector.shape_cast %18 : vector<1x128xi1> to vector<1x128xi1>
    %305 = vector.broadcast %304 : vector<1x128xi1> to vector<8x128xi1>
    %306 = vector.broadcast %cst_98 : f32 to vector<8x128xf32>
    %307 = arith.select %305, %303, %306 : vector<8x128xi1>, vector<8x128xf32>
    %308 = arith.mulf %307, %307 : vector<8x128xf32>
    %cst_99 = arith.constant dense<0.000000e+00> : vector<8xf32>
    %309 = vector.multi_reduction <add>, %308, %cst_99 [1] : vector<8x128xf32> to vector<8xf32>
    %310 = vector.shape_cast %309 : vector<8xf32> to vector<8x1xf32>
    %cst_100 = arith.constant 3.125000e-02 : f32
    %311 = vector.broadcast %cst_100 : f32 to vector<8x1xf32>
    %312 = arith.mulf %310, %311 : vector<8x1xf32>
    %c0_101 = arith.constant 0 : index
    %c0_102 = arith.constant 0 : index
    %313 = vector.load %arg8[%c0_101, %c0_102] : memref<8x1xf32, #tpu.memory_space<vmem>>, vector<8x1xf32>
    %cst_103 = arith.constant 9.99999974E-6 : f32
    %314 = vector.broadcast %cst_103 : f32 to vector<8x1xf32>
    %315 = arith.addf %312, %314 : vector<8x1xf32>
    %316 = math.rsqrt %315 : vector<8x1xf32>
    %317 = arith.mulf %313, %316 : vector<8x1xf32>
    %c0_104 = arith.constant 0 : index
    %c0_105 = arith.constant 0 : index
    %318 = vector.load %arg9[%c0_104, %c0_105] : memref<8x1xf32, #tpu.memory_space<vmem>>, vector<8x1xf32>
    %319 = arith.mulf %301, %317 : vector<8x1xf32>
    %320 = arith.subf %318, %319 : vector<8x1xf32>
    %321 = vector.broadcast %317 : vector<8x1xf32> to vector<8x128xf32>
    %322 = arith.mulf %293, %321 : vector<8x128xf32>
    %323 = vector.broadcast %320 : vector<8x1xf32> to vector<8x128xf32>
    %324 = arith.addf %322, %323 : vector<8x128xf32>
    %cst_106 = arith.constant 0.000000e+00 : f32
    %325 = vector.broadcast %cst_106 : f32 to vector<8x128xf32>
    %326 = arith.maximumf %324, %325 : vector<8x128xf32>
    %c0_107 = arith.constant 0 : index
    %c0_108 = arith.constant 0 : index
    %327 = vector.load %arg10[%c0_107, %c0_108] : memref<8x4xbf16, #tpu.memory_space<vmem>>, vector<8x4xbf16>
    %328 = arith.truncf %19 : vector<4x128xf32> to vector<4x128xbf16>
    %cst_109 = arith.constant dense<0.000000e+00> : vector<8x128xf32>
    %329 = tpu.matmul %327, %328, %cst_109 {dimension_numbers = #tpu.dot_dimension_numbers<[1], [0], [0], [1], [0, 0, 1, 1], [], []>} : vector<8x4xbf16>, vector<4x128xbf16>, vector<8x128xf32> -> vector<8x128xf32>
    %cst_110 = arith.constant 0.000000e+00 : f32
    %330 = vector.shape_cast %18 : vector<1x128xi1> to vector<1x128xi1>
    %331 = vector.broadcast %330 : vector<1x128xi1> to vector<8x128xi1>
    %332 = vector.broadcast %cst_110 : f32 to vector<8x128xf32>
    %333 = arith.select %331, %329, %332 : vector<8x128xi1>, vector<8x128xf32>
    %cst_111 = arith.constant dense<0.000000e+00> : vector<8xf32>
    %334 = vector.multi_reduction <add>, %333, %cst_111 [1] : vector<8x128xf32> to vector<8xf32>
    %335 = vector.shape_cast %334 : vector<8xf32> to vector<8x1xf32>
    %cst_112 = arith.constant 3.125000e-02 : f32
    %336 = vector.broadcast %cst_112 : f32 to vector<8x1xf32>
    %337 = arith.mulf %335, %336 : vector<8x1xf32>
    %338 = vector.broadcast %337 : vector<8x1xf32> to vector<8x128xf32>
    %339 = arith.subf %329, %338 : vector<8x128xf32>
    %cst_113 = arith.constant 0.000000e+00 : f32
    %340 = vector.shape_cast %18 : vector<1x128xi1> to vector<1x128xi1>
    %341 = vector.broadcast %340 : vector<1x128xi1> to vector<8x128xi1>
    %342 = vector.broadcast %cst_113 : f32 to vector<8x128xf32>
    %343 = arith.select %341, %339, %342 : vector<8x128xi1>, vector<8x128xf32>
    %344 = arith.mulf %343, %343 : vector<8x128xf32>
    %cst_114 = arith.constant dense<0.000000e+00> : vector<8xf32>
    %345 = vector.multi_reduction <add>, %344, %cst_114 [1] : vector<8x128xf32> to vector<8xf32>
    %346 = vector.shape_cast %345 : vector<8xf32> to vector<8x1xf32>
    %cst_115 = arith.constant 3.125000e-02 : f32
    %347 = vector.broadcast %cst_115 : f32 to vector<8x1xf32>
    %348 = arith.mulf %346, %347 : vector<8x1xf32>
    %c0_116 = arith.constant 0 : index
    %c0_117 = arith.constant 0 : index
    %349 = vector.load %arg11[%c0_116, %c0_117] : memref<8x1xf32, #tpu.memory_space<vmem>>, vector<8x1xf32>
    %cst_118 = arith.constant 9.99999974E-6 : f32
    %350 = vector.broadcast %cst_118 : f32 to vector<8x1xf32>
    %351 = arith.addf %348, %350 : vector<8x1xf32>
    %352 = math.rsqrt %351 : vector<8x1xf32>
    %353 = arith.mulf %349, %352 : vector<8x1xf32>
    %c0_119 = arith.constant 0 : index
    %c0_120 = arith.constant 0 : index
    %354 = vector.load %arg12[%c0_119, %c0_120] : memref<8x1xf32, #tpu.memory_space<vmem>>, vector<8x1xf32>
    %355 = arith.mulf %337, %353 : vector<8x1xf32>
    %356 = arith.subf %354, %355 : vector<8x1xf32>
    %357 = vector.broadcast %353 : vector<8x1xf32> to vector<8x128xf32>
    %358 = arith.mulf %329, %357 : vector<8x128xf32>
    %359 = vector.broadcast %356 : vector<8x1xf32> to vector<8x128xf32>
    %360 = arith.addf %358, %359 : vector<8x128xf32>
    %361 = arith.addf %326, %360 : vector<8x128xf32>
    %c0_121 = arith.constant 0 : index
    %c0_122 = arith.constant 0 : index
    %362 = vector.load %arg13[%c0_121, %c0_122] : memref<8x128xf32, #tpu.memory_space<vmem>>, vector<8x128xf32>
    tpu.vector_store %arg13[%c0_121, %c0_122], %361 {strides = array<i32>} : memref<8x128xf32, #tpu.memory_space<vmem>>, vector<8x128xf32>,
    return
  }
}

</mosaic_0001>

<llo_original>
// kernel: resnet_block_forward.1
$region0: #{resnet_block_forward.1}
  #allocation0 [shape = 'u32[]', space=smem, size = 0x4, offset = 0x4, fixed_abs, tag = 'smem constant byte address 0x4 - core index']
  #allocation1 [shape = 'u32[144,128]{1,0:T(1,128)}', space=vmem, size = 0x12000, scoped, tag = 'internal scratch']
  %s0 = inlined_call_operand.vmem [shape: f32[4,128], index: 0, kind: input, shape index: {}]
  %s1 = inlined_call_operand.vmem [shape: bf16[8,28], index: 1, kind: input, shape index: {}]
  %s2 = inlined_call_operand.vmem [shape: f32[8,1], index: 2, kind: input, shape index: {}]
  %s3 = inlined_call_operand.vmem [shape: f32[8,1], index: 3, kind: input, shape index: {}]
  %s4 = inlined_call_operand.vmem [shape: bf16[8,40], index: 4, kind: input, shape index: {}]
  %s5 = inlined_call_operand.vmem [shape: f32[8,1], index: 5, kind: input, shape index: {}]
  %s6 = inlined_call_operand.vmem [shape: f32[8,1], index: 6, kind: input, shape index: {}]
  %s7 = inlined_call_operand.vmem [shape: bf16[8,24], index: 7, kind: input, shape index: {}]
  %s8 = inlined_call_operand.vmem [shape: f32[8,1], index: 8, kind: input, shape index: {}]
  %s9 = inlined_call_operand.vmem [shape: f32[8,1], index: 9, kind: input, shape index: {}]
  %s10 = inlined_call_operand.vmem [shape: bf16[8,4], index: 10, kind: input, shape index: {}]
  %s11 = inlined_call_operand.vmem [shape: f32[8,1], index: 11, kind: input, shape index: {}]
  %s12 = inlined_call_operand.vmem [shape: f32[8,1], index: 12, kind: input, shape index: {}]
  %s13 = inlined_call_operand.vmem [shape: f32[8,128], index: 13, kind: output, shape index: {}]
  %s14 = sld [smem:[#allocation0]]
  $region62: #{resnet_block_forward.1} parent=0
    _
  %s16 = ssub.s32 1, %s14
  %s17 = scalar_select 0, %s16, %s14
  // Predicated region
  $region2: #{resnet_block_forward.1} parent=0 // pred_check
    _
  $region3: #{resnet_block_forward.1} parent=0 // pred_check_branch
    %19 = sbr.rel (0) target = $region5
  $region4: #{resnet_block_forward.1} parent=0 // pred_region
    _
  $region5: #{resnet_block_forward.1} parent=0 // pred_fallthru
    _
  // Predicated region
  $region6: #{resnet_block_forward.1} parent=0 // pred_check
    _
  $region7: #{resnet_block_forward.1} parent=0 // pred_check_branch
    %21 = sbr.rel (0) target = $region9
  $region8: #{resnet_block_forward.1} parent=0 // pred_region
    _
  $region9: #{resnet_block_forward.1} parent=0 // pred_fallthru
    _
  // Predicated region
  $region10: #{resnet_block_forward.1} parent=0 // pred_check
    _
  $region11: #{resnet_block_forward.1} parent=0 // pred_check_branch
    %23 = sbr.rel (0) target = $region13
  $region12: #{resnet_block_forward.1} parent=0 // pred_region
    _
  $region13: #{resnet_block_forward.1} parent=0 // pred_fallthru
    _
  // Predicated region
  $region14: #{resnet_block_forward.1} parent=0 // pred_check
    _
  $region15: #{resnet_block_forward.1} parent=0 // pred_check_branch
    %25 = sbr.rel (0) target = $region17
  $region16: #{resnet_block_forward.1} parent=0 // pred_region
    _
  $region17: #{resnet_block_forward.1} parent=0 // pred_fallthru
    _
  // Predicated region
  $region18: #{resnet_block_forward.1} parent=0 // pred_check
    _
  $region19: #{resnet_block_forward.1} parent=0 // pred_check_branch
    %27 = sbr.rel (0) target = $region21
  $region20: #{resnet_block_forward.1} parent=0 // pred_region
    _
  $region21: #{resnet_block_forward.1} parent=0 // pred_fallthru
    _
  // Predicated region
  $region22: #{resnet_block_forward.1} parent=0 // pred_check
    _
  $region23: #{resnet_block_forward.1} parent=0 // pred_check_branch
    %29 = sbr.rel (0) target = $region25
  $region24: #{resnet_block_forward.1} parent=0 // pred_region
    _
  $region25: #{resnet_block_forward.1} parent=0 // pred_fallthru
    _
  // Predicated region
  $region26: #{resnet_block_forward.1} parent=0 // pred_check
    _
  $region27: #{resnet_block_forward.1} parent=0 // pred_check_branch
    %31 = sbr.rel (0) target = $region29
  $region28: #{resnet_block_forward.1} parent=0 // pred_region
    _
  $region29: #{resnet_block_forward.1} parent=0 // pred_fallthru
    _
  // Predicated region
  $region30: #{resnet_block_forward.1} parent=0 // pred_check
    _
  $region31: #{resnet_block_forward.1} parent=0 // pred_check_branch
    %33 = sbr.rel (0) target = $region33
  $region32: #{resnet_block_forward.1} parent=0 // pred_region
    _
  $region33: #{resnet_block_forward.1} parent=0 // pred_fallthru
    _
  // Predicated region
  $region34: #{resnet_block_forward.1} parent=0 // pred_check
    _
  $region35: #{resnet_block_forward.1} parent=0 // pred_check_branch
    %35 = sbr.rel (0) target = $region37
  $region36: #{resnet_block_forward.1} parent=0 // pred_region
    _
  $region37: #{resnet_block_forward.1} parent=0 // pred_fallthru
    _
  // Predicated region
  $region38: #{resnet_block_forward.1} parent=0 // pred_check
    _
  $region39: #{resnet_block_forward.1} parent=0 // pred_check_branch
    %37 = sbr.rel (0) target = $region41
  $region40: #{resnet_block_forward.1} parent=0 // pred_region
    _
  $region41: #{resnet_block_forward.1} parent=0 // pred_fallthru
    _
  // Predicated region
  $region42: #{resnet_block_forward.1} parent=0 // pred_check
    _
  $region43: #{resnet_block_forward.1} parent=0 // pred_check_branch
    %39 = sbr.rel (0) target = $region45
  $region44: #{resnet_block_forward.1} parent=0 // pred_region
    _
  $region45: #{resnet_block_forward.1} parent=0 // pred_fallthru
    _
  // Predicated region
  $region46: #{resnet_block_forward.1} parent=0 // pred_check
    _
  $region47: #{resnet_block_forward.1} parent=0 // pred_check_branch
    %41 = sbr.rel (0) target = $region49
  $region48: #{resnet_block_forward.1} parent=0 // pred_region
    _
  $region49: #{resnet_block_forward.1} parent=0 // pred_fallthru
    _
  // Predicated region
  $region50: #{resnet_block_forward.1} parent=0 // pred_check
    _
  $region51: #{resnet_block_forward.1} parent=0 // pred_check_branch
    %43 = sbr.rel (0) target = $region53
  $region52: #{resnet_block_forward.1} parent=0 // pred_region
    _
  $region53: #{resnet_block_forward.1} parent=0 // pred_fallthru
    _
  %v45 = vlaneseq
  %v46 = vand.u32 %v45, 127
  %vm47 = vcmp.lt.s32.totalorder %v46, 0
  %v48 = vsub.s32 0, %v46
  %v49 = vsel %vm47, %v48, %v46
  %v50 = vshrl.u32 %v49, 4
  %v51 = vand.u32 %v49, 15
  %v52 = vsub.s32 0, %v51
  %v53 = vsel %vm47, %v52, %v51
  %vm54 = vcmp.ne.s32.totalorder %v53, 0
  %vm55 = vcmp.lt.s32.totalorder %v53, 0
  %vm56 = vmand %vm55, %vm54
  %v57 = vadd.s32 %v53, 16
  %v58 = vsel %vm56, %v57, %v53
  %vm59 = vcmp.lt.s32.totalorder %v46, 32
  %v60 = vld [vmem:[%s0] sm:$0xf]
  %61 = vrot.lane.b32.xlu0 %v60, 3
  %v62 = vpop.permute.xlu0 %61
  %v63 = vadd.s32 %v58, 4294967293
  %vm64 = vcmp.gt.s32.totalorder %v63, 0
  %v65 = vsel %vm64, %v63, 0
  %vm66 = vcmp.lt.s32.totalorder %v65, 15
  %v67 = vsel %vm66, %v65, 15
  %v68 = vsub.s32 %v67, %v58
  %vm69 = vcmp.eq.s32.totalorder %v68, 0
  %v70 = vsel %vm69, 1, 0
  %vm71 = vcmp.eq.s32.totalorder %v70, 1
  %v72 = vsel %vm71, %v60, %v62
  %vm73 = vcmp.eq.s32.totalorder %v68, 4294967295
  %74 = vrot.lane.b32.xlu0 %v60, 1
  %v75 = vpop.permute.xlu0 %74
  %v76 = vsel %vm73, 1, 0
  %vm77 = vcmp.eq.s32.totalorder %v76, 1
  %v78 = vsel %vm77, %v75, %v72
  %vm79 = vcmp.eq.s32.totalorder %v68, 4294967294
  %80 = vrot.lane.b32.xlu0 %v60, 2
  %v81 = vpop.permute.xlu0 %80
  %v82 = vsel %vm79, 1, 0
  %vm83 = vcmp.eq.s32.totalorder %v82, 1
  %v84 = vsel %vm83, %v81, %v78
  %v85 = vadd.s32 %v58, 4294967294
  %vm86 = vcmp.gt.s32.totalorder %v85, 0
  %v87 = vsel %vm86, %v85, 0
  %vm88 = vcmp.lt.s32.totalorder %v87, 15
  %v89 = vsel %vm88, %v87, 15
  %v90 = vsub.s32 %v89, %v58
  %vm91 = vcmp.eq.s32.totalorder %v90, 0
  %v92 = vsel %vm91, 1, 0
  %vm93 = vcmp.eq.s32.totalorder %v92, 1
  %v94 = vsel %vm93, %v60, %v81
  %vm95 = vcmp.eq.s32.totalorder %v90, 4294967295
  %v96 = vsel %vm95, 1, 0
  %vm97 = vcmp.eq.s32.totalorder %v96, 1
  %v98 = vsel %vm97, %v75, %v94
  %v99 = vadd.s32 %v58, 4294967295
  %vm100 = vcmp.gt.s32.totalorder %v99, 0
  %v101 = vsel %vm100, %v99, 0
  %vm102 = vcmp.lt.s32.totalorder %v101, 15
  %v103 = vsel %vm102, %v101, 15
  %v104 = vsub.s32 %v103, %v58
  %vm105 = vcmp.eq.s32.totalorder %v104, 0
  %v106 = vsel %vm105, 1, 0
  %vm107 = vcmp.eq.s32.totalorder %v106, 1
  %v108 = vsel %vm107, %v60, %v75
  %109 = vrot.lane.b32.xlu0 %v60, 127
  %v110 = vpop.permute.xlu0 %109
  %v111 = vadd.s32 %v58, 1
  %vm112 = vcmp.gt.s32.totalorder %v111, 0
  %v113 = vsel %vm112, %v111, 0
  %vm114 = vcmp.lt.s32.totalorder %v113, 15
  %v115 = vsel %vm114, %v113, 15
  %v116 = vsub.s32 %v115, %v58
  %vm117 = vcmp.eq.s32.totalorder %v116, 0
  %v118 = vsel %vm117, 1, 0
  %vm119 = vcmp.eq.s32.totalorder %v118, 1
  %v120 = vsel %vm119, %v60, %v110
  %121 = vrot.lane.b32.xlu0 %v60, 126
  %v122 = vpop.permute.xlu0 %121
  %v123 = vadd.s32 %v58, 2
  %vm124 = vcmp.gt.s32.totalorder %v123, 0
  %v125 = vsel %vm124, %v123, 0
  %vm126 = vcmp.lt.s32.totalorder %v125, 15
  %v127 = vsel %vm126, %v125, 15
  %v128 = vsub.s32 %v127, %v58
  %vm129 = vcmp.eq.s32.totalorder %v128, 0
  %v130 = vsel %vm129, 1, 0
  %vm131 = vcmp.eq.s32.totalorder %v130, 1
  %v132 = vsel %vm131, %v60, %v122
  %vm133 = vcmp.eq.s32.totalorder %v128, 1
  %v134 = vsel %vm133, 1, 0
  %vm135 = vcmp.eq.s32.totalorder %v134, 1
  %v136 = vsel %vm135, %v110, %v132
  %137 = vrot.lane.b32.xlu0 %v60, 125
  %v138 = vpop.permute.xlu0 %137
  %v139 = vadd.s32 %v58, 3
  %vm140 = vcmp.gt.s32.totalorder %v139, 0
  %v141 = vsel %vm140, %v139, 0
  %vm142 = vcmp.lt.s32.totalorder %v141, 15
  %v143 = vsel %vm142, %v141, 15
  %v144 = vsub.s32 %v143, %v58
  %vm145 = vcmp.eq.s32.totalorder %v144, 0
  %v146 = vsel %vm145, 1, 0
  %vm147 = vcmp.eq.s32.totalorder %v146, 1
  %v148 = vsel %vm147, %v60, %v138
  %vm149 = vcmp.eq.s32.totalorder %v144, 1
  %v150 = vsel %vm149, 1, 0
  %vm151 = vcmp.eq.s32.totalorder %v150, 1
  %v152 = vsel %vm151, %v110, %v148
  %vm153 = vcmp.eq.s32.totalorder %v144, 2
  %v154 = vsel %vm153, 1, 0
  %vm155 = vcmp.eq.s32.totalorder %v154, 1
  %v156 = vsel %vm155, %v122, %v152
  %v158 = vrot.slane %v98, 4
  %v161 = vrot.slane %v60, 4
  %v164 = vrot.slane %v136, 4
  %vm166 = vcmask 1043456
  %v167 = vsel %vm166, %v84, %v158
  %v168 = vsel %vm166, %v108, %v161
  %v169 = vsel %vm166, %v120, %v164
  %v170 = vpack.c.bf16 %v168, %v167
  %v171 = vpack.c.bf16 %v156, %v169
  %v172 = vld [vmem:[%s1] sm:$0xf]
  %vm173 = vcmask 228352
  %v175 = vsel %vm173, %v172, 0
  %vm177 = vcmask 1045504
  %v179 = vsel %vm177, %v171, 0
  %181 = vmatprep.subr.bf16.mxu0 0
  %182 = vmatpush1.bf16.msra.mxu0 %v170
  %183 = vmatprep.subr.bf16.mxu0 0
  %184 = vmatpush1.bf16.msra.mxu0 %v179
  %185 = vmatprep.subr.bf16.mxu0 0
  %186 = vmatpush1.bf16.msra.mxu0 0
  %187 = vmatprep.subr.bf16.mxu0 0
  %188 = vmatpush1.bf16.msra.mxu0 0
  %189 = vmatprep.subr.bf16.mxu0 0
  %190 = vmatpush1.bf16.msra.mxu0 0
  %191 = vmatprep.subr.bf16.mxu0 0
  %192 = vmatpush1.bf16.msra.mxu0 0
  %193 = vmatprep.subr.bf16.mxu0 0
  %194 = vmatpush1.bf16.msra.mxu0 0
  %195 = vmatprep.subr.bf16.mxu0 0
  %196 = vmatpush1.bf16.msra.mxu0 0
  %197 = vmatprep.subr.bf16.mxu0 0
  %198 = vmatpush1.bf16.msra.mxu0 0
  %199 = vmatprep.subr.bf16.mxu0 0
  %200 = vmatpush1.bf16.msra.mxu0 0
  %201 = vmatprep.subr.bf16.mxu0 0
  %202 = vmatpush1.bf16.msra.mxu0 0
  %203 = vmatprep.subr.bf16.mxu0 0
  %204 = vmatpush1.bf16.msra.mxu0 0
  %205 = vmatprep.subr.bf16.mxu0 0
  %206 = vmatpush1.bf16.msra.mxu0 0
  %207 = vmatprep.subr.bf16.mxu0 0
  %208 = vmatpush1.bf16.msra.mxu0 0
  %209 = vmatprep.subr.bf16.mxu0 0
  %210 = vmatpush1.bf16.msra.mxu0 0
  %211 = vmatprep.subr.bf16.mxu0 0
  %212 = vmatpush1.bf16.msra.mxu0 0
  %213 = vmatprep.mubr.bf16.mxu0 0
  %214 = vmatmul.mubr.bf16.gmra.mrb[0].mxu0 %v175
  %v215 = vpop.f32.mrb[0].mxu0
  %v216 = vadd.f32 0.0, %v215
  %v217 = vpop.f32.mrb[0].mxu0
  %v218 = vpop.f32.mrb[0].mxu0
  %v219 = vpop.f32.mrb[0].mxu0
  %220 = vdwg.mxu0
  %v221 = vsel %vm59, 1, 0
  %vm222 = vcmp.eq.s32.totalorder %v221, 1
  %v223 = vsel %vm222, %v216, 0.0
  %224 = vadd.xlane.f32.xlu0 %v223
  %v225 = vpop.xlane.xlu0 %224
  %v226 = vmul.f32 %v225, 0.03125
  %v227 = vsub.f32 %v216, %v226
  %v228 = vsel %vm222, %v227, 0.0
  %v229 = vmul.f32 %v228, %v228
  %230 = vadd.xlane.f32.xlu0 %v229
  %v231 = vpop.xlane.xlu0 %230
  %v232 = vmul.f32 %v231, 0.03125
  %v233 = vld [vmem:[%s2] sm:$0xff]
  %v234 = vadd.f32 %v232, 1e-05
  %v235 = vrsqrt.pop %v234
  %v236 = vmul.f32 %v233, %v235
  %v237 = vld [vmem:[%s3] sm:$0xff]
  %v238 = vmul.f32 %v226, %v236
  %v239 = vsub.f32 %v237, %v238
  %241 = vset.pattern.permute.xlu0 0
  %242 = vperm.xlu0 %241, %v236
  %v243 = vpop.permute.xlu0 %242
  %v245 = vmul.f32 %v216, %v243
  %247 = vset.pattern.permute.xlu0 0
  %248 = vperm.xlu0 %247, %v239
  %v249 = vpop.permute.xlu0 %248
  %v251 = vadd.f32 %v245, %v249
  %v252 = vmax.f32 %v251, 0.0
  %253 = vrot.lane.b32.xlu0 %v252, 2
  %v254 = vpop.permute.xlu0 %253
  %v255 = vsel %vm93, %v252, %v254
  %256 = vrot.lane.b32.xlu0 %v252, 1
  %v257 = vpop.permute.xlu0 %256
  %v258 = vsel %vm97, %v257, %v255
  %v259 = vsel %vm107, %v252, %v257
  %260 = vrot.lane.b32.xlu0 %v252, 127
  %v261 = vpop.permute.xlu0 %260
  %v262 = vsel %vm119, %v252, %v261
  %263 = vrot.lane.b32.xlu0 %v252, 126
  %v264 = vpop.permute.xlu0 %263
  %v265 = vsel %vm131, %v252, %v264
  %v266 = vsel %vm135, %v261, %v265
  %v267 = vpack.c.bf16 %v259, %v258
  %v268 = vpack.c.bf16 %v262, %v252
  %v269 = vpack.c.bf16 %v266, %v266
  %v270 = vld [vmem:[%s4] sm:$0xf]
  %vm271 = vcmask 326656
  %v273 = vsel %vm271, %v270, 0
  %v276 = vsel %vm166, %v269, 0
  %278 = vmatprep.subr.bf16.mxu0 0
  %279 = vmatpush1.bf16.msra.mxu0 %v267
  %280 = vmatprep.subr.bf16.mxu0 0
  %281 = vmatpush1.bf16.msra.mxu0 %v268
  %282 = vmatprep.subr.bf16.mxu0 0
  %283 = vmatpush1.bf16.msra.mxu0 %v276
  %284 = vmatprep.subr.bf16.mxu0 0
  %285 = vmatpush1.bf16.msra.mxu0 0
  %286 = vmatprep.subr.bf16.mxu0 0
  %287 = vmatpush1.bf16.msra.mxu0 0
  %288 = vmatprep.subr.bf16.mxu0 0
  %289 = vmatpush1.bf16.msra.mxu0 0
  %290 = vmatprep.subr.bf16.mxu0 0
  %291 = vmatpush1.bf16.msra.mxu0 0
  %292 = vmatprep.subr.bf16.mxu0 0
  %293 = vmatpush1.bf16.msra.mxu0 0
  %294 = vmatprep.subr.bf16.mxu0 0
  %295 = vmatpush1.bf16.msra.mxu0 0
  %296 = vmatprep.subr.bf16.mxu0 0
  %297 = vmatpush1.bf16.msra.mxu0 0
  %298 = vmatprep.subr.bf16.mxu0 0
  %299 = vmatpush1.bf16.msra.mxu0 0
  %300 = vmatprep.subr.bf16.mxu0 0
  %301 = vmatpush1.bf16.msra.mxu0 0
  %302 = vmatprep.subr.bf16.mxu0 0
  %303 = vmatpush1.bf16.msra.mxu0 0
  %304 = vmatprep.subr.bf16.mxu0 0
  %305 = vmatpush1.bf16.msra.mxu0 0
  %306 = vmatprep.subr.bf16.mxu0 0
  %307 = vmatpush1.bf16.msra.mxu0 0
  %308 = vmatprep.subr.bf16.mxu0 0
  %309 = vmatpush1.bf16.msra.mxu0 0
  %310 = vmatprep.mubr.bf16.mxu0 0
  %311 = vmatmul.mubr.bf16.gmra.mrb[0].mxu0 %v273
  %v312 = vpop.f32.mrb[0].mxu0
  %v313 = vadd.f32 0.0, %v312
  %v314 = vpop.f32.mrb[0].mxu0
  %v315 = vpop.f32.mrb[0].mxu0
  %v316 = vpop.f32.mrb[0].mxu0
  %317 = vdwg.mxu0
  %v318 = vsel %vm222, %v313, 0.0
  %319 = vadd.xlane.f32.xlu0 %v318
  %v320 = vpop.xlane.xlu0 %319
  %v321 = vmul.f32 %v320, 0.03125
  %v322 = vsub.f32 %v313, %v321
  %v323 = vsel %vm222, %v322, 0.0
  %v324 = vmul.f32 %v323, %v323
  %325 = vadd.xlane.f32.xlu0 %v324
  %v326 = vpop.xlane.xlu0 %325
  %v327 = vmul.f32 %v326, 0.03125
  %v328 = vld [vmem:[%s5] sm:$0xff]
  %v329 = vadd.f32 %v327, 1e-05
  %v330 = vrsqrt.pop %v329
  %v331 = vmul.f32 %v328, %v330
  %v332 = vld [vmem:[%s6] sm:$0xff]
  %v333 = vmul.f32 %v321, %v331
  %v334 = vsub.f32 %v332, %v333
  %336 = vset.pattern.permute.xlu0 0
  %337 = vperm.xlu0 %336, %v331
  %v338 = vpop.permute.xlu0 %337
  %v340 = vmul.f32 %v313, %v338
  %342 = vset.pattern.permute.xlu0 0
  %343 = vperm.xlu0 %342, %v334
  %v344 = vpop.permute.xlu0 %343
  %v346 = vadd.f32 %v340, %v344
  %v347 = vmax.f32 %v346, 0.0
  %348 = vrot.lane.b32.xlu0 %v347, 1
  %v349 = vpop.permute.xlu0 %348
  %v350 = vsel %vm107, %v347, %v349
  %351 = vrot.lane.b32.xlu0 %v347, 127
  %v352 = vpop.permute.xlu0 %351
  %v353 = vsel %vm119, %v347, %v352
  %v354 = vpack.c.bf16 %v347, %v350
  %v355 = vpack.c.bf16 %v353, %v353
  %v356 = vld [vmem:[%s7] sm:$0xf]
  %vm357 = vcmask 195584
  %v359 = vsel %vm357, %v356, 0
  %v362 = vsel %vm166, %v355, 0
  %364 = vmatprep.subr.bf16.mxu0 0
  %365 = vmatpush1.bf16.msra.mxu0 %v354
  %366 = vmatprep.subr.bf16.mxu0 0
  %367 = vmatpush1.bf16.msra.mxu0 %v362
  %368 = vmatprep.subr.bf16.mxu0 0
  %369 = vmatpush1.bf16.msra.mxu0 0
  %370 = vmatprep.subr.bf16.mxu0 0
  %371 = vmatpush1.bf16.msra.mxu0 0
  %372 = vmatprep.subr.bf16.mxu0 0
  %373 = vmatpush1.bf16.msra.mxu0 0
  %374 = vmatprep.subr.bf16.mxu0 0
  %375 = vmatpush1.bf16.msra.mxu0 0
  %376 = vmatprep.subr.bf16.mxu0 0
  %377 = vmatpush1.bf16.msra.mxu0 0
  %378 = vmatprep.subr.bf16.mxu0 0
  %379 = vmatpush1.bf16.msra.mxu0 0
  %380 = vmatprep.subr.bf16.mxu0 0
  %381 = vmatpush1.bf16.msra.mxu0 0
  %382 = vmatprep.subr.bf16.mxu0 0
  %383 = vmatpush1.bf16.msra.mxu0 0
  %384 = vmatprep.subr.bf16.mxu0 0
  %385 = vmatpush1.bf16.msra.mxu0 0
  %386 = vmatprep.subr.bf16.mxu0 0
  %387 = vmatpush1.bf16.msra.mxu0 0
  %388 = vmatprep.subr.bf16.mxu0 0
  %389 = vmatpush1.bf16.msra.mxu0 0
  %390 = vmatprep.subr.bf16.mxu0 0
  %391 = vmatpush1.bf16.msra.mxu0 0
  %392 = vmatprep.subr.bf16.mxu0 0
  %393 = vmatpush1.bf16.msra.mxu0 0
  %394 = vmatprep.subr.bf16.mxu0 0
  %395 = vmatpush1.bf16.msra.mxu0 0
  %396 = vmatprep.mubr.bf16.mxu0 0
  %397 = vmatmul.mubr.bf16.gmra.mrb[0].mxu0 %v359
  %v398 = vpop.f32.mrb[0].mxu0
  %v399 = vadd.f32 0.0, %v398
  %v400 = vpop.f32.mrb[0].mxu0
  %v401 = vpop.f32.mrb[0].mxu0
  %v402 = vpop.f32.mrb[0].mxu0
  %403 = vdwg.mxu0
  %v404 = vsel %vm222, %v399, 0.0
  %405 = vadd.xlane.f32.xlu0 %v404
  %v406 = vpop.xlane.xlu0 %405
  %v407 = vmul.f32 %v406, 0.03125
  %v408 = vsub.f32 %v399, %v407
  %v409 = vsel %vm222, %v408, 0.0
  %v410 = vmul.f32 %v409, %v409
  %411 = vadd.xlane.f32.xlu0 %v410
  %v412 = vpop.xlane.xlu0 %411
  %v413 = vmul.f32 %v412, 0.03125
  %v414 = vld [vmem:[%s8] sm:$0xff]
  %v415 = vadd.f32 %v413, 1e-05
  %v416 = vrsqrt.pop %v415
  %v417 = vmul.f32 %v414, %v416
  %v418 = vld [vmem:[%s9] sm:$0xff]
  %v419 = vmul.f32 %v407, %v417
  %v420 = vsub.f32 %v418, %v419
  %422 = vset.pattern.permute.xlu0 0
  %423 = vperm.xlu0 %422, %v417
  %v424 = vpop.permute.xlu0 %423
  %v426 = vmul.f32 %v399, %v424
  %428 = vset.pattern.permute.xlu0 0
  %429 = vperm.xlu0 %428, %v420
  %v430 = vpop.permute.xlu0 %429
  %v432 = vadd.f32 %v426, %v430
  %v433 = vmax.f32 %v432, 0.0
  %v434 = vld [vmem:[%s10] sm:$0xf]
  %v435 = vpack.c.bf16 %v60, %v60
  %vm436 = vcmask 31744
  %v438 = vsel %vm436, %v434, 0
  %vm440 = vcmask 1041408
  %v442 = vsel %vm440, %v435, 0
  %444 = vmatprep.subr.bf16.mxu0 0
  %445 = vmatpush1.bf16.msra.mxu0 %v442
  %446 = vmatprep.subr.bf16.mxu0 0
  %447 = vmatpush1.bf16.msra.mxu0 0
  %448 = vmatprep.subr.bf16.mxu0 0
  %449 = vmatpush1.bf16.msra.mxu0 0
  %450 = vmatprep.subr.bf16.mxu0 0
  %451 = vmatpush1.bf16.msra.mxu0 0
  %452 = vmatprep.subr.bf16.mxu0 0
  %453 = vmatpush1.bf16.msra.mxu0 0
  %454 = vmatprep.subr.bf16.mxu0 0
  %455 = vmatpush1.bf16.msra.mxu0 0
  %456 = vmatprep.subr.bf16.mxu0 0
  %457 = vmatpush1.bf16.msra.mxu0 0
  %458 = vmatprep.subr.bf16.mxu0 0
  %459 = vmatpush1.bf16.msra.mxu0 0
  %460 = vmatprep.subr.bf16.mxu0 0
  %461 = vmatpush1.bf16.msra.mxu0 0
  %462 = vmatprep.subr.bf16.mxu0 0
  %463 = vmatpush1.bf16.msra.mxu0 0
  %464 = vmatprep.subr.bf16.mxu0 0
  %465 = vmatpush1.bf16.msra.mxu0 0
  %466 = vmatprep.subr.bf16.mxu0 0
  %467 = vmatpush1.bf16.msra.mxu0 0
  %468 = vmatprep.subr.bf16.mxu0 0
  %469 = vmatpush1.bf16.msra.mxu0 0
  %470 = vmatprep.subr.bf16.mxu0 0
  %471 = vmatpush1.bf16.msra.mxu0 0
  %472 = vmatprep.subr.bf16.mxu0 0
  %473 = vmatpush1.bf16.msra.mxu0 0
  %474 = vmatprep.subr.bf16.mxu0 0
  %475 = vmatpush1.bf16.msra.mxu0 0
  %476 = vmatprep.mubr.bf16.mxu0 0
  %477 = vmatmul.mubr.bf16.gmra.mrb[0].mxu0 %v438
  %v478 = vpop.f32.mrb[0].mxu0
  %v479 = vadd.f32 0.0, %v478
  %v480 = vpop.f32.mrb[0].mxu0
  %v481 = vpop.f32.mrb[0].mxu0
  %v482 = vpop.f32.mrb[0].mxu0
  %483 = vdwg.mxu0
  %v484 = vsel %vm222, %v479, 0.0
  %485 = vadd.xlane.f32.xlu0 %v484
  %v486 = vpop.xlane.xlu0 %485
  %v487 = vmul.f32 %v486, 0.03125
  %v488 = vsub.f32 %v479, %v487
  %v489 = vsel %vm222, %v488, 0.0
  %v490 = vmul.f32 %v489, %v489
  %491 = vadd.xlane.f32.xlu0 %v490
  %v492 = vpop.xlane.xlu0 %491
  %v493 = vmul.f32 %v492, 0.03125
  %v494 = vld [vmem:[%s11] sm:$0xff]
  %v495 = vadd.f32 %v493, 1e-05
  %v496 = vrsqrt.pop %v495
  %v497 = vmul.f32 %v494, %v496
  %v498 = vld [vmem:[%s12] sm:$0xff]
  %v499 = vmul.f32 %v487, %v497
  %v500 = vsub.f32 %v498, %v499
  %502 = vset.pattern.permute.xlu0 0
  %503 = vperm.xlu0 %502, %v497
  %v504 = vpop.permute.xlu0 %503
  %v506 = vmul.f32 %v479, %v504
  %508 = vset.pattern.permute.xlu0 0
  %509 = vperm.xlu0 %508, %v500
  %v510 = vpop.permute.xlu0 %509
  %v512 = vadd.f32 %v506, %v510
  %v513 = vadd.f32 %v433, %v512
  %514 = vst [vmem:[%s13] sm:$0xff] %v513
  // Predicated region
  $region54: #{resnet_block_forward.1} parent=0 // pred_check
    _
  $region55: #{resnet_block_forward.1} parent=0 // pred_check_branch
    %516 = sbr.rel (0) target = $region57
  $region56: #{resnet_block_forward.1} parent=0 // pred_region
    _
  $region57: #{resnet_block_forward.1} parent=0 // pred_fallthru
    _
  // Predicated region
  $region58: #{resnet_block_forward.1} parent=0 // pred_check
    _
  $region59: #{resnet_block_forward.1} parent=0 // pred_check_branch
    %518 = sbr.rel (0) target = $region61
  $region60: #{resnet_block_forward.1} parent=0 // pred_region
    _
  $region61: #{resnet_block_forward.1} parent=0 // pred_fallthru
    _

</llo_original>
